<compile_context>
chip_gen: v7x
topology: tpu7x:2x2x1
jax: 0.10.0
libtpu: 0.0.40
codegen_flags: <defaults>
</compile_context>

<pallas_src>
import functools

import jax
import jax.numpy as jnp
from jax import lax
from jax.experimental import pallas as pl
from jax.experimental.pallas import tpu as pltpu


def _round_up(x, m):
    return ((x + m - 1) // m) * m


def _cdiv(a, b):
    return (a + b - 1) // b


def _sigmoid_bce_kernel(x_ref, t_ref, m_ref, o_ref, acc_ref, *,
                        inv_len, row_len, tile_l, mask_tail):
    k = pl.program_id(1)

    @pl.when(k == 0)
    def _():
        acc_ref[...] = jnp.zeros_like(acc_ref)

    # All math in f32, matching the `.float()` casts in the PyTorch forward.
    x = x_ref[...].astype(jnp.float32)
    t = t_ref[...].astype(jnp.float32)
    m = m_ref[...].astype(jnp.float32)

    # Numerically-stable BCE with logits (same formula PyTorch uses):
    #   loss = max(x, 0) - x * t + log(1 + exp(-|x|))
    loss = (jnp.maximum(x, 0.0) - x * t + jnp.log1p(jnp.exp(-jnp.abs(x)))) * m

    # Ragged L tail: past column L the loaded block (including the mask block)
    # holds undefined data, so gate contributions with an explicit compare.
    # Static no-op when L % TL == 0.
    if mask_tail:
        col = lax.broadcasted_iota(jnp.int32, loss.shape, 1) + k * tile_l
        loss = jnp.where(col < row_len, loss, 0.0)

    # Lane-dense accumulation: fold the TL columns into a (TB, 128) partial
    # sum with pure VPU vreg adds -- no per-step XLU cross-lane reduce and no
    # masked width-1 stores on the hot path.
    s = loss[:, 0:128]
    for j in range(1, tile_l // 128):
        s = s + loss[:, j * 128:(j + 1) * 128]
    acc_ref[...] += s

    @pl.when(k == pl.num_programs(1) - 1)
    def _():
        # Single cross-lane reduce per B-tile; 1/L uses the original row
        # length, reproducing .mean(dim=1) over the full row.
        o_ref[...] = jnp.sum(acc_ref[...], axis=1, keepdims=True) * inv_len


def sigmoid_binary_cross_entropy_loss(inputs, targets, mask, *, tb=256, tl=2048):
    """Pallas TPU implementation of SigmoidBinaryCrossEntropyLoss.forward.

    inputs/targets may be f32 or bf16, mask may be float or int (e.g. int8);
    math is performed in f32.  Returns (B,) float32 per-row means.
    """
    assert inputs.shape == targets.shape == mask.shape
    B, L = inputs.shape

    # Tile sizes: TL multiple of 128 (prefer growing TL: each block row is a
    # long contiguous DMA run), TB multiple of 8.  Defaults keep the
    # double-buffered input footprint at ~12 MiB f32 / ~6 MiB bf16.
    TL = min(_round_up(L, 128), tl)
    TB = min(_round_up(B, 8), tb)
    # v7x megacore: ensure >= 2 blocks along the "parallel" B axis whenever B
    # allows, so both TensorCores get work.
    if _cdiv(B, TB) < 2 and B > 8:
        TB = max(8, _round_up(_cdiv(B, 2), 8))

    grid = (_cdiv(B, TB), _cdiv(L, TL))

    kernel = functools.partial(
        _sigmoid_bce_kernel,
        inv_len=float(1.0 / L),
        row_len=L,
        tile_l=TL,
        mask_tail=(L % TL != 0),
    )

    bytes_in = sum(int(a.size) * a.dtype.itemsize for a in (inputs, targets, mask))

    out = pl.pallas_call(
        kernel,
        out_shape=jax.ShapeDtypeStruct((B, 1), jnp.float32),
        grid_spec=pltpu.PrefetchScalarGridSpec(
            num_scalar_prefetch=0,
            grid=grid,
            in_specs=[
                pl.BlockSpec((TB, TL), lambda i, k: (i, k)),
                pl.BlockSpec((TB, TL), lambda i, k: (i, k)),
                pl.BlockSpec((TB, TL), lambda i, k: (i, k)),
            ],
            # Same output block for every L step -> resident accumulator target.
            out_specs=pl.BlockSpec((TB, 1), lambda i, k: (i, 0)),
            scratch_shapes=[pltpu.VMEM((TB, 128), jnp.float32)],
        ),
        compiler_params=pltpu.CompilerParams(
            dimension_semantics=("parallel", "arbitrary"),
            vmem_limit_bytes=32 * 1024 * 1024,
        ),
        cost_estimate=pl.CostEstimate(
            flops=6 * B * L,
            transcendentals=2 * B * L,
            bytes_accessed=bytes_in + B * 4,
        ),
    )(inputs, targets, mask)

    return out[:, 0]  # (B,)


def _reference(inputs, targets, mask):
    x = inputs.astype(jnp.float32)
    t = targets.astype(jnp.float32)
    m = mask.astype(jnp.float32)
    loss = jnp.maximum(x, 0.0) - x * t + jnp.log1p(jnp.exp(-jnp.abs(x)))
    return jnp.mean(loss * m, axis=1)


if __name__ == "__main__":
    key = jax.random.PRNGKey(0)
    k1, k2, k3 = jax.random.split(key, 3)

    # 1) Small shapes consistent with the module's (batch_size, len) contract.
    #    Exercises the ragged-L tail masking (L=8 inside a 128-wide tile).
    B, L = 2, 8
    inputs = jax.random.normal(k1, (B, L), dtype=jnp.float32) * 2.0
    targets = jax.random.bernoulli(k2, 0.5, (B, L)).astype(jnp.float32)
    mask = jax.random.bernoulli(k3, 0.7, (B, L)).astype(jnp.float32)

    out = jax.block_until_ready(
        sigmoid_binary_cross_entropy_loss(inputs, targets, mask))
    ref = _reference(inputs, targets, mask)
    assert out.shape == (B,)
    assert jnp.allclose(out, ref, atol=1e-5, rtol=1e-5)

    # 2) Multi-tile accumulator path with ragged tails on BOTH axes (no
    #    padding anywhere) at still-small shapes via shrunken tiles.
    B2, L2 = 20, 300
    i2 = jax.random.normal(k1, (B2, L2), dtype=jnp.float32) * 3.0
    t2 = jax.random.bernoulli(k2, 0.5, (B2, L2)).astype(jnp.float32)
    m2 = jax.random.bernoulli(k3, 0.7, (B2, L2)).astype(jnp.float32)
    out2 = jax.block_until_ready(
        sigmoid_binary_cross_entropy_loss(i2, t2, m2, tb=8, tl=128))
    ref2 = _reference(i2, t2, m2)
    assert out2.shape == (B2,)
    assert jnp.allclose(out2, ref2, atol=1e-5, rtol=1e-5)

    # 3) Reduced-precision input path (bf16 logits/targets, int8 mask) that
    #    halves HBM traffic; math is still f32 in-kernel.  Also exercises the
    #    v7x megacore TB split (B=12 -> two B blocks of 8).
    B3, L3 = 12, 640
    i3 = (jax.random.normal(k1, (B3, L3), dtype=jnp.float32) * 2.0).astype(jnp.bfloat16)
    t3 = jax.random.bernoulli(k2, 0.5, (B3, L3)).astype(jnp.bfloat16)
    m3 = jax.random.bernoulli(k3, 0.7, (B3, L3)).astype(jnp.int8)
    out3 = jax.block_until_ready(sigmoid_binary_cross_entropy_loss(i3, t3, m3))
    ref3 = _reference(i3, t3, m3)
    assert out3.shape == (B3,)
    assert jnp.allclose(out3, ref3, atol=1e-5, rtol=1e-5)

    print("KERNEL_OK")
</pallas_src>

<mosaic_0001>
module attributes {stable_mosaic.version = 11 : i64} {
  func.func @_sigmoid_bce_kernel(%arg0: i32, %arg1: i32, %arg2: memref<8x128xf32, #tpu.memory_space<vmem>>, %arg3: memref<8x128xf32, #tpu.memory_space<vmem>>, %arg4: memref<8x128xf32, #tpu.memory_space<vmem>>, %arg5: memref<8x1xf32, #tpu.memory_space<vmem>>, %arg6: memref<8x128xf32, #tpu.memory_space<vmem>>) attributes {dimension_semantics = [#tpu.dimension_semantics<parallel>, #tpu.dimension_semantics<arbitrary>], iteration_bounds = array<i64: 1, 1>, scalar_prefetch = 0 : i64, scratch_operands = 1 : i64, tpu.core_type = #tpu.core_type<tc>, window_params = [{transform_indices = @transform_0, window_bounds = array<i64: 8, 128>}, {transform_indices = @transform_1, window_bounds = array<i64: 8, 128>}, {transform_indices = @transform_2, window_bounds = array<i64: 8, 128>}, {transform_indices = @transform_3, window_bounds = array<i64: 8, 1>}]} {
    %c0_i32 = arith.constant 0 : i32
    %0 = arith.cmpi eq, %arg1, %c0_i32 : i32
    %1 = arith.extui %0 : i1 to i32
    %c0_i32_0 = arith.constant 0 : i32
    %2 = arith.cmpi ne, %1, %c0_i32_0 : i32
    scf.if %2 {
      %cst_14 = arith.constant 0.000000e+00 : f32
      %31 = vector.broadcast %cst_14 : f32 to vector<8x128xf32>
      %c0_15 = arith.constant 0 : index
      %c0_16 = arith.constant 0 : index
      %32 = vector.load %arg6[%c0_15, %c0_16] : memref<8x128xf32, #tpu.memory_space<vmem>>, vector<8x128xf32>
      tpu.vector_store %arg6[%c0_15, %c0_16], %31 {strides = array<i32>} : memref<8x128xf32, #tpu.memory_space<vmem>>, vector<8x128xf32>,
    } else {
    }
    %c0 = arith.constant 0 : index
    %c0_1 = arith.constant 0 : index
    %3 = vector.load %arg2[%c0, %c0_1] : memref<8x128xf32, #tpu.memory_space<vmem>>, vector<8x128xf32>
    %c0_2 = arith.constant 0 : index
    %c0_3 = arith.constant 0 : index
    %4 = vector.load %arg3[%c0_2, %c0_3] : memref<8x128xf32, #tpu.memory_space<vmem>>, vector<8x128xf32>
    %c0_4 = arith.constant 0 : index
    %c0_5 = arith.constant 0 : index
    %5 = vector.load %arg4[%c0_4, %c0_5] : memref<8x128xf32, #tpu.memory_space<vmem>>, vector<8x128xf32>
    %cst = arith.constant 0.000000e+00 : f32
    %6 = vector.broadcast %cst : f32 to vector<8x128xf32>
    %7 = arith.maximumf %3, %6 : vector<8x128xf32>
    %8 = arith.mulf %3, %4 : vector<8x128xf32>
    %9 = arith.subf %7, %8 : vector<8x128xf32>
    %10 = math.absf %3 : vector<8x128xf32>
    %cst_6 = arith.constant 0.000000e+00 : f32
    %11 = vector.broadcast %cst_6 : f32 to vector<8x128xf32>
    %12 = arith.subf %11, %10 : vector<8x128xf32>
    %13 = math.exp %12 : vector<8x128xf32>
    %14 = math.log1p %13 : vector<8x128xf32>
    %15 = arith.addf %9, %14 : vector<8x128xf32>
    %16 = arith.mulf %15, %5 : vector<8x128xf32>
    %17 = tpu.iota {dimensions = array<i32: 1>} : vector<8x128xi32>
    %c128_i32 = arith.constant 128 : i32
    %18 = arith.muli %arg1, %c128_i32 : i32
    %19 = vector.broadcast %18 : i32 to vector<8x128xi32>
    %20 = arith.addi %17, %19 : vector<8x128xi32>
    %c8_i32 = arith.constant 8 : i32
    %21 = vector.broadcast %c8_i32 : i32 to vector<8x128xi32>
    %22 = arith.cmpi slt, %20, %21 : vector<8x128xi32>
    %cst_7 = arith.constant 0.000000e+00 : f32
    %23 = vector.broadcast %cst_7 : f32 to vector<8x128xf32>
    %24 = arith.select %22, %16, %23 : vector<8x128xi1>, vector<8x128xf32>
    %c0_8 = arith.constant 0 : index
    %c0_9 = arith.constant 0 : index
    %25 = vector.load %arg6[%c0_8, %c0_9] : memref<8x128xf32, #tpu.memory_space<vmem>>, vector<8x128xf32>
    %26 = arith.addf %25, %24 : vector<8x128xf32>
    %c0_10 = arith.constant 0 : index
    %c0_11 = arith.constant 0 : index
    %27 = vector.load %arg6[%c0_10, %c0_11] : memref<8x128xf32, #tpu.memory_space<vmem>>, vector<8x128xf32>
    tpu.vector_store %arg6[%c0_10, %c0_11], %26 {strides = array<i32>} : memref<8x128xf32, #tpu.memory_space<vmem>>, vector<8x128xf32>,
    %c0_i32_12 = arith.constant 0 : i32
    %28 = arith.cmpi eq, %arg1, %c0_i32_12 : i32
    %29 = arith.extui %28 : i1 to i32
    %c0_i32_13 = arith.constant 0 : i32
    %30 = arith.cmpi ne, %29, %c0_i32_13 : i32
    scf.if %30 {
      %c0_14 = arith.constant 0 : index
      %c0_15 = arith.constant 0 : index
      %31 = vector.load %arg6[%c0_14, %c0_15] : memref<8x128xf32, #tpu.memory_space<vmem>>, vector<8x128xf32>
      %cst_16 = arith.constant dense<0.000000e+00> : vector<8xf32>
      %32 = vector.multi_reduction <add>, %31, %cst_16 [1] : vector<8x128xf32> to vector<8xf32>
      %33 = vector.shape_cast %32 : vector<8xf32> to vector<8x1xf32>
      %cst_17 = arith.constant 1.250000e-01 : f32
      %34 = vector.broadcast %cst_17 : f32 to vector<8x1xf32>
      %35 = arith.mulf %33, %34 : vector<8x1xf32>
      %c0_18 = arith.constant 0 : index
      %c0_19 = arith.constant 0 : index
      %36 = vector.load %arg5[%c0_18, %c0_19] : memref<8x1xf32, #tpu.memory_space<vmem>>, vector<8x1xf32>
      tpu.vector_store %arg5[%c0_18, %c0_19], %35 {strides = array<i32>} : memref<8x1xf32, #tpu.memory_space<vmem>>, vector<8x1xf32>,
    } else {
    }
    return
  }
  func.func @transform_0(%arg0: i32, %arg1: i32) -> (i32, i32) {
    %c0_i32 = arith.constant 0 : i32
    return %arg0, %arg1 : i32, i32
  }
  func.func @transform_1(%arg0: i32, %arg1: i32) -> (i32, i32) {
    %c0_i32 = arith.constant 0 : i32
    return %arg0, %arg1 : i32, i32
  }
  func.func @transform_2(%arg0: i32, %arg1: i32) -> (i32, i32) {
    %c0_i32 = arith.constant 0 : i32
    return %arg0, %arg1 : i32, i32
  }
  func.func @transform_3(%arg0: i32, %arg1: i32) -> (i32, i32) {
    %c0_i32 = arith.constant 0 : i32
    %c0_i32_0 = arith.constant 0 : i32
    return %arg0, %c0_i32 : i32, i32
  }
}

</mosaic_0001>

<llo_original>
// kernel: tpu_custom_call.1
$region0: #{tpu_custom_call.1}
  #allocation0 [shape = 'u32[]', space=smem, size = 0x4, offset = 0x4, fixed_abs, tag = 'smem constant byte address 0x4 - core index']
  #allocation1 [shape = 'u32[144,128]{1,0:T(1,128)}', space=vmem, size = 0x12000, scoped, tag = 'internal scratch']
  #allocation2 [shape = 'f32[8,128]{1,0:T(8,128)}', space=vmem, size = 0x1000, scoped, tag = 'scratch operand']
  %s0 = inlined_call_operand.hbm [shape: f32[2,8], index: 0, kind: input, shape index: {}]
  %s1 = inlined_call_operand.vmem [shape: f32[2,8], index: 1, kind: input, shape index: {}]
  %s2 = inlined_call_operand.vmem [shape: f32[2,8], index: 2, kind: input, shape index: {}]
  %s3 = inlined_call_operand.vmem [shape: f32[2,1], index: 3, kind: output, shape index: {}]
  %s4 = sld [smem:[#allocation0]]
  $region64: #{tpu_custom_call.1} parent=0
    _
  %s6 = ssub.s32 1, %s4
  %s7 = scalar_select 0, %s6, %s4
  $region1: #{tpu_custom_call.1} parent=0
    #allocation3 [shape = 'u8[4096]{0}', space=vmem, size = 0x1000, scoped, tag = 'input window, operand 0, single buffered']
    #allocation4 [shape = 's32[1]{0}', space=sflag, size = 0x4, scoped, tag = 'scoped memory for tpu_custom_call.1']
    #allocation5 [shape = 'u8[4096]{0}', space=vmem, size = 0x1000, scoped, tag = 'output window, operand 0, single buffered']
    %8 = vsyncpa [#allocation4], 0
    // Predicated region
    $region2: #{tpu_custom_call.1} parent=1 // pred_check
      _
    $region3: #{tpu_custom_call.1} parent=1 // pred_check_branch
      %10 = sbr.rel (0) target = $region5
    $region4: #{tpu_custom_call.1} parent=1 // pred_region
      %s12 = ssub.s32 128, 32
      %13 = vsyncadd [#allocation4], %s12
      %s14 = sshll.u32 [#allocation3], 4
      %s15 = int_to_ptr.vmem [resolvable:$true] %s14
      %20 = dma.hbm_to_vmem [thread:$0]  %s0, 32, %s15, [#allocation4], 32, 32, 2
    $region5: #{tpu_custom_call.1} parent=1 // pred_fallthru
      _
    // Predicated region
    $region6: #{tpu_custom_call.1} parent=1 // pred_check
      _
    $region7: #{tpu_custom_call.1} parent=1 // pred_check_branch
      %22 = sbr.rel (0) target = $region9
    $region8: #{tpu_custom_call.1} parent=1 // pred_region
      _
    $region9: #{tpu_custom_call.1} parent=1 // pred_fallthru
      _
    // Predicated region
    $region10: #{tpu_custom_call.1} parent=1 // pred_check
      _
    $region11: #{tpu_custom_call.1} parent=1 // pred_check_branch
      %24 = sbr.rel (0) target = $region13
    $region12: #{tpu_custom_call.1} parent=1 // pred_region
      _
    $region13: #{tpu_custom_call.1} parent=1 // pred_fallthru
      _
    // Predicated region
    $region14: #{tpu_custom_call.1} parent=1 // pred_check
      _
    $region15: #{tpu_custom_call.1} parent=1 // pred_check_branch
      %26 = sbr.rel (0) target = $region17
    $region16: #{tpu_custom_call.1} parent=1 // pred_region
      %27 = dma.done [#allocation4], 128
    $region17: #{tpu_custom_call.1} parent=1 // pred_fallthru
      _
    %p28 = scmp.eq.s32.totalorder 0, 0
    // Predicated region
    $region18: #{tpu_custom_call.1} parent=1 // pred_check
      %p29 = pneg %p28
    $region19: #{tpu_custom_call.1} parent=1 // pred_check_branch
      %31 = sbr.rel (%p29) target = $region21
    $region20: #{tpu_custom_call.1} parent=1 // pred_region
      %32 = vst [vmem:[#allocation2] sm:$0xff] 0.0
    $region21: #{tpu_custom_call.1} parent=1 // pred_fallthru
      _
    %v33 = vld [vmem:[#allocation3] sm:$0xff]
    %v34 = vld [vmem:[%s1] sm:$0xff]
    %v35 = vld [vmem:[%s2] sm:$0xff]
    %v36 = vmax.f32 %v33, 0.0
    %v37 = vmul.f32 %v33, %v34
    %v38 = vsub.f32 %v36, %v37
    %v39 = vand.u32 2147483647, %v33
    %v40 = vsub.f32 0.0, %v39
    %v41 = vmul.f32 %v40, 1.442695
    %v42 = vpow.pop %v41
    %v43 = vadd.f32 %v42, 1.0
    %v44 = vlog2.pop %v43
    %v45 = vmul.f32 %v44, 0.6931472
    %v46 = vmul.f32 -0.5, %v42
    %v47 = vadd.f32 %v46, 1.0
    %v48 = vmul.f32 %v47, %v42
    %v49 = vand.u32 2147483647, %v42
    %vm50 = vcmp.lt.f32.partialorder %v49, 0.0004427343
    %v51 = vsel %vm50, %v48, %v45
    %v52 = vadd.f32 %v38, %v51
    %v53 = vmul.f32 %v52, %v35
    %v54 = vlaneseq
    %v55 = vand.u32 %v54, 127
    %s56 = smul.u32 0, 128
    %v57 = vstv %s56
    %v58 = vadd.s32 %v55, %v57
    %vm59 = vcmp.lt.s32.totalorder %v58, 8
    %v60 = vsel %vm59, %v53, 0.0
    %v61 = vld [vmem:[#allocation2] sm:$0xff]
    %v62 = vadd.f32 %v61, %v60
    %63 = vst [vmem:[#allocation2] sm:$0xff] %v62
    // Predicated region
    $region22: #{tpu_custom_call.1} parent=1 // pred_check
      %p64 = pneg %p28
    $region23: #{tpu_custom_call.1} parent=1 // pred_check_branch
      %66 = sbr.rel (%p64) target = $region25
    $region24: #{tpu_custom_call.1} parent=1 // pred_region
      %v67 = vld [vmem:[#allocation2] sm:$0xff]
      %68 = vadd.xlane.f32.xlu0 %v67
      %v69 = vpop.xlane.xlu0 %68
      %v70 = vmul.f32 %v69, 0.125
      %vm71 = vcmask 7168
      %72 = vst.msk [vmem:[#allocation5] sm:$0xff] %vm71, %v70
    $region25: #{tpu_custom_call.1} parent=1 // pred_fallthru
      _
    // Predicated region
    $region26: #{tpu_custom_call.1} parent=1 // pred_check
      _
    $region27: #{tpu_custom_call.1} parent=1 // pred_check_branch
      %74 = sbr.rel (0) target = $region29
    $region28: #{tpu_custom_call.1} parent=1 // pred_region
      // Predicated region
      $region30: #{tpu_custom_call.1} parent=28 // pred_check
        _
      $region31: #{tpu_custom_call.1} parent=28 // pred_check_branch
        %76 = sbr.rel (0) target = $region33
      $region32: #{tpu_custom_call.1} parent=28 // pred_region
        // Predicated region
        $region34: #{tpu_custom_call.1} parent=32 // pred_check
          _
        $region35: #{tpu_custom_call.1} parent=32 // pred_check_branch
          %78 = sbr.rel target = $region37
        $region36: #{tpu_custom_call.1} parent=32 // pred_region
          // Predicated region
          $region49: #{tpu_custom_call.1} parent=36 // pred_check
            _
          $region50: #{tpu_custom_call.1} parent=36 // pred_check_branch
            %93 = sbr.rel (0) target = $region52
          $region51: #{tpu_custom_call.1} parent=36 // pred_region
            loop: start=0, step=1, limit=1
            $region53: #{tpu_custom_call.1} parent=51 // loop_pre_header
              _
            $region54: #{tpu_custom_call.1} parent=51 // loop_header
              %s96 = sphi 0, %s100
              %p97 = scmp.ge.s32.totalorder %s96, 1
              %s101 = sphi [#allocation5], [#allocation5]
              %s102 = sphi %s3, %s3
            $region55: #{tpu_custom_call.1} parent=51 // loop_header_branch
              %99 = sbr.rel (%p97) target = $region59
            $region56: #{tpu_custom_call.1} parent=51 // loop_body
              %v103 = vld [vmem:[%s101] sm:$0x3]
              %104 = vst [vmem:[%s102] sm:$0x3] %v103
            $region57: #{tpu_custom_call.1} parent=51 // loop_footer
              %s100 = sadd.s32 1, %s96
            $region58: #{tpu_custom_call.1} parent=51 // loop_footer_branch
              %95 = sbr.rel target = $region54
            $region59: #{tpu_custom_call.1} parent=51 // loop_exit
              _
          $region52: #{tpu_custom_call.1} parent=36 // pred_fallthru
            _
        $region37: #{tpu_custom_call.1} parent=32 // pred_fallthru
          _
        // Predicated region
        $region38: #{tpu_custom_call.1} parent=32 // pred_check
          _
        $region39: #{tpu_custom_call.1} parent=32 // pred_check_branch
          %80 = sbr.rel (0) target = $region41
        $region40: #{tpu_custom_call.1} parent=32 // pred_region
          loop: start=0, step=1, limit=1
          $region42: #{tpu_custom_call.1} parent=40 // loop_pre_header
            _
          $region43: #{tpu_custom_call.1} parent=40 // loop_header
            %s83 = sphi 0, %s87
            %p84 = scmp.ge.s32.totalorder %s83, 1
            %s88 = sphi [#allocation5], [#allocation5]
            %s89 = sphi %s3, %s3
          $region44: #{tpu_custom_call.1} parent=40 // loop_header_branch
            %86 = sbr.rel (%p84) target = $region48
          $region45: #{tpu_custom_call.1} parent=40 // loop_body
            %v90 = vld [vmem:[%s88] sm:$0x3]
            %91 = vst [vmem:[%s89] sm:$0x3] %v90
          $region46: #{tpu_custom_call.1} parent=40 // loop_footer
            %s87 = sadd.s32 1, %s83
          $region47: #{tpu_custom_call.1} parent=40 // loop_footer_branch
            %82 = sbr.rel target = $region43
          $region48: #{tpu_custom_call.1} parent=40 // loop_exit
            _
        $region41: #{tpu_custom_call.1} parent=32 // pred_fallthru
          _
      $region33: #{tpu_custom_call.1} parent=28 // pred_fallthru
        _
      %105 = vnop
    $region29: #{tpu_custom_call.1} parent=1 // pred_fallthru
      _
    // Predicated region
    $region60: #{tpu_custom_call.1} parent=1 // pred_check
      _
    $region61: #{tpu_custom_call.1} parent=1 // pred_check_branch
      %107 = sbr.rel (0) target = $region63
    $region62: #{tpu_custom_call.1} parent=1 // pred_region
      _
    $region63: #{tpu_custom_call.1} parent=1 // pred_fallthru
      _
    %108 = vsyncpa [#allocation4], 1

</llo_original>
